<compile_context>
chip_gen: v7x
topology: tpu7x:2x2x1
jax: 0.10.0
libtpu: 0.0.40
codegen_flags: <defaults>
</compile_context>

<pallas_src>
import functools
import math

import jax
import jax.numpy as jnp
from jax import lax
from jax.experimental import pallas as pl
from jax.experimental.pallas import tpu as pltpu

_UNROLL_K = 8  # fully unroll the extraction loop up to this k; roll beyond it.


def _weldon_kernel(x_ref, o_ref, *, n_max, n_min, compute_dtype):
    """Per-row: sum(top n_max)/n_max + sum(bottom n_min)/n_min.

    n_max / n_min are static ints. Top-k is done by iterative max/min
    extraction, removing exactly one occurrence per step (duplicates are kept,
    matching torch.topk's value semantics). The block's lane dimension equals
    the full H*W extent, so reductions never see physical lane padding and no
    in-kernel masking is required even when hw % 128 != 0.
    NOTE: if the input legitimately contains +/-inf, the sentinel-based removal
    may pick the wrong duplicate occurrence (values/means are still bounded).
    """
    x = x_ref[...].astype(compute_dtype)            # (R, HW)
    r, hw = x.shape

    need_removal = (n_max > 1) or (n_min > 1)
    iota = (lax.broadcasted_iota(jnp.int32, (r, hw), 1)
            if need_removal else None)

    neg_inf = jnp.array(-jnp.inf, dtype=compute_dtype)
    pos_inf = jnp.array(jnp.inf, dtype=compute_dtype)

    def _remove_one(cur, m, sentinel):
        # Remove exactly one occurrence of the extracted extremum m.
        # TODO(synk): a packed value+index single max-reduce (16-bit value +
        # 16-bit lane index in one int32 via pltpu.bitcast for bf16) would save
        # ~2 wide VPU passes and one XLU reduce per extraction step.
        sel = jnp.min(jnp.where(cur == m, iota, hw), axis=-1, keepdims=True)
        return jnp.where(iota == sel, sentinel, cur)

    def _extract_sum(vals, k, reduce_fn, sentinel):
        if k <= 0:
            return jnp.zeros((r, 1), jnp.float32)
        if k == 1:
            return reduce_fn(vals, axis=-1, keepdims=True).astype(jnp.float32)
        if k <= _UNROLL_K:
            cur = vals
            acc = jnp.zeros((r, 1), jnp.float32)
            for i in range(k):
                m = reduce_fn(cur, axis=-1, keepdims=True)
                acc = acc + m.astype(jnp.float32)
                if i + 1 < k:  # removal after the last extraction is dead work
                    cur = _remove_one(cur, m, sentinel)
            return acc
        # Large k (e.g. fractional nMax/nMin): rolled loop bounds compile time
        # and vreg live ranges.
        # TODO(synk): a threshold-select (binary search of the k-th value plus
        # tie correction) would make this ~O(log hw) wide passes instead of
        # O(k), keeping very large k near the HBM roofline.
        def body(_, carry):
            cur, acc = carry
            m = reduce_fn(cur, axis=-1, keepdims=True)
            return _remove_one(cur, m, sentinel), acc + m.astype(jnp.float32)

        _, acc = lax.fori_loop(0, k, body,
                               (vals, jnp.zeros((r, 1), jnp.float32)))
        return acc

    out = _extract_sum(x, n_max, jnp.max, neg_inf) * jnp.float32(1.0 / n_max)
    if n_min > 0:
        out = out + _extract_sum(x, n_min, jnp.min, pos_inf) * jnp.float32(1.0 / n_min)

    o_ref[...] = out.astype(o_ref.dtype)


def _tpu_info():
    """Best-effort generation info: (vmem_bytes, tensorcores_per_chip, is_v5)."""
    kind = ""
    try:
        kind = jax.devices()[0].device_kind.lower()
    except Exception:
        pass
    is_v7 = "v7" in kind
    is_v5 = "v5" in kind
    num_tc = 2 if is_v7 else 1
    # Conservative (v7x-safe) default if the chip generation is unknown.
    vmem_bytes = 64 * 1024 * 1024 if (is_v7 or not kind) else 128 * 1024 * 1024
    try:  # prefer the authoritative query when available
        vmem_bytes = int(pltpu.get_tpu_info().vmem_capacity_bytes)
    except Exception:
        pass
    return vmem_bytes, num_tc, is_v5


def _per_row_vmem_bytes(hw, in_itemsize, compute_itemsize, need_removal):
    """Accounted VMEM bytes per block row, using the padded lane width."""
    hw_pad = ((hw + 127) // 128) * 128
    # 2x double-buffered input tile + 1 live compute-width copy of the tile.
    per_row = hw_pad * (2 * in_itemsize + compute_itemsize)
    if need_removal:
        # k>1 only: ~2 extra wide temporaries + int32 iota.
        per_row += hw_pad * (2 * compute_itemsize + 4)
    return per_row


def _choose_tile_rows(rows, per_row, budget_bytes, num_tc):
    """Largest 8-aligned row tile under the VMEM budget, with at least 2 grid
    steps per TensorCore and a step count that is a multiple of the TC count
    (balanced block counts across v7x's two cores)."""
    if rows <= 8:
        return rows  # full-extent sublane block (always legal)
    budget_tile = max(8, budget_bytes // per_row)
    steps = max(2 * num_tc, -(-rows // budget_tile))
    steps = -(-steps // num_tc) * num_tc
    tile = -(-rows // steps)
    tile = ((tile + 7) // 8) * 8
    # Never exceed the number of whole 8-row groups (last block may be partial).
    tile = min(tile, (rows // 8) * 8)
    return max(8, int(tile))


def weldon_pooling(x, n_max=1, n_min=None):
    """JAX/Pallas equivalent of WeldonPooling.forward."""
    if n_min is None:
        n_min = n_max

    if x.ndim == 4:
        b, c, h, w = x.shape
        three_d = False
    elif x.ndim == 3:
        c, h, w = x.shape
        b = 1
        three_d = True
    else:
        raise ValueError("WeldonPooling: input must be 3D or 4D")

    hw = h * w

    # Resolve fractional / non-positive n (mirrors the torch module), and clamp
    # to hw: torch.topk would error for k > hw, and the iterative extraction
    # would otherwise start summing +/-inf sentinels.
    def _resolve(n):
        if n <= 0:
            return 0
        if n < 1:
            return max(1, int(math.floor(n * hw)))
        return int(n)

    k_max = min(_resolve(n_max), hw)
    k_min = min(_resolve(n_min), hw)
    if k_max <= 0:
        raise ValueError("k_max must be >= 1 for a well-defined output")

    rows = b * c
    xf = x.reshape(rows, hw)  # trivial reshape, no extra HBM copy

    vmem_bytes, num_tc, is_v5 = _tpu_info()
    small_vmem = vmem_bytes < 100 * 1024 * 1024       # v7x (64 MiB) vs v5e/v6e
    budget = (20 if small_vmem else 56) * 1024 * 1024
    vmem_limit = (48 if small_vmem else 96) * 1024 * 1024

    in_dtype = xf.dtype
    # bf16 wide work stays bf16 on v6e/v7x (bf16 VPU); v5e has no bf16 VPU, so
    # promote to f32 there; everything else promotes to f32.
    if in_dtype == jnp.bfloat16 and not is_v5:
        compute_dtype = jnp.bfloat16
    else:
        compute_dtype = jnp.float32

    in_itemsize = jnp.dtype(in_dtype).itemsize
    compute_itemsize = jnp.dtype(compute_dtype).itemsize
    need_removal = (k_max > 1) or (k_min > 1)

    per_row = _per_row_vmem_bytes(hw, in_itemsize, compute_itemsize, need_removal)
    tile_r = _choose_tile_rows(rows, per_row, budget, num_tc)
    grid = -(-rows // tile_r)

    if tile_r * per_row > vmem_limit:
        # TODO(synk): add an HW-axis ("arbitrary") grid dimension with running
        # max/min (running top-k) accumulators so arbitrarily large spatial
        # extents fit a single VMEM block budget.
        raise NotImplementedError(
            "WeldonPooling Pallas kernel: H*W too large for a single VMEM block "
            f"(needs ~{tile_r * per_row} bytes, limit {vmem_limit}).")

    # Advisory cost: one HBM read of the input, ~2 ops/element per extraction.
    cost = pl.CostEstimate(
        flops=int(2 * (k_max + max(k_min, 1)) * rows * hw),
        transcendentals=0,
        bytes_accessed=int(rows * hw * in_itemsize + rows * in_itemsize),
    )

    out = pl.pallas_call(
        functools.partial(_weldon_kernel, n_max=k_max, n_min=k_min,
                          compute_dtype=compute_dtype),
        out_shape=jax.ShapeDtypeStruct((rows, 1), x.dtype),
        grid_spec=pltpu.PrefetchScalarGridSpec(
            num_scalar_prefetch=0,
            grid=(grid,),
            in_specs=[pl.BlockSpec((tile_r, hw), lambda i: (i, 0))],
            out_specs=pl.BlockSpec((tile_r, 1), lambda i: (i, 0)),
        ),
        compiler_params=pltpu.CompilerParams(
            dimension_semantics=("parallel",),
            vmem_limit_bytes=vmem_limit,
        ),
        cost_estimate=cost,
    )(xf)

    if three_d:
        return out.reshape(c, 1, 1)
    return out.reshape(b, c, 1, 1)


def _reference(x4, k_max, k_min):
    b, c, h, w = x4.shape
    xs = jnp.sort(x4.astype(jnp.float32).reshape(b, c, h * w), axis=-1)
    res = jnp.mean(xs[..., h * w - k_max:], axis=-1)
    if k_min > 0:
        res = res + jnp.mean(xs[..., :k_min], axis=-1)
    return res.reshape(b, c, 1, 1)


if __name__ == "__main__":
    key = jax.random.PRNGKey(0)
    k1, k2, k3 = jax.random.split(key, 3)

    # Default configuration: nMax = nMin = 1 (max + min pooling), 4D input.
    x = jax.random.normal(k1, (2, 4, 16, 16), dtype=jnp.float32)
    y1 = jax.block_until_ready(weldon_pooling(x, n_max=1))
    assert y1.shape == (2, 4, 1, 1)
    assert jnp.allclose(y1, _reference(x, 1, 1), atol=1e-5, rtol=1e-5)

    # Top-k configuration (unrolled extraction path): nMax = nMin = 3.
    y3 = jax.block_until_ready(weldon_pooling(x, n_max=3, n_min=3))
    assert jnp.allclose(y3, _reference(x, 3, 3), atol=1e-5, rtol=1e-5)

    # Fractional n -> k = floor(0.05 * 256) = 12 > _UNROLL_K: rolled fori_loop path.
    yfrac = jax.block_until_ready(weldon_pooling(x, n_max=0.05, n_min=0.05))
    assert jnp.allclose(yfrac, _reference(x, 12, 12), atol=1e-4, rtol=1e-4)

    # Rows not a multiple of the tile -> exercises the cdiv / partial-block path.
    xr = jax.random.normal(k2, (1, 10, 16, 16), dtype=jnp.float32)
    yr = jax.block_until_ready(weldon_pooling(xr, n_max=2, n_min=2))
    assert yr.shape == (1, 10, 1, 1)
    assert jnp.allclose(yr, _reference(xr, 2, 2), atol=1e-5, rtol=1e-5)

    # 3D input path.
    x3 = jax.random.normal(k3, (8, 16, 16), dtype=jnp.float32)
    y3d = jax.block_until_ready(weldon_pooling(x3, n_max=1))
    assert y3d.shape == (8, 1, 1)
    assert jnp.allclose(y3d.reshape(1, 8, 1, 1),
                        _reference(x3[None], 1, 1), atol=1e-5, rtol=1e-5)

    # bf16 input: bf16 wide work on v6e/v7x (f32 on v5e), f32 accumulation.
    xb = x.astype(jnp.bfloat16)
    yb = jax.block_until_ready(weldon_pooling(xb, n_max=2, n_min=2))
    assert yb.dtype == jnp.bfloat16
    assert jnp.allclose(yb.astype(jnp.float32), _reference(xb, 2, 2),
                        atol=5e-2, rtol=5e-2)

    print("KERNEL_OK")
</pallas_src>

<mosaic_0001>
module attributes {stable_mosaic.version = 11 : i64} {
  func.func @_weldon_kernel(%arg0: i32, %arg1: memref<8x256xf32, #tpu.memory_space<vmem>>, %arg2: memref<8x1xf32, #tpu.memory_space<vmem>>) attributes {dimension_semantics = [#tpu.dimension_semantics<parallel>], iteration_bounds = array<i64: 1>, scalar_prefetch = 0 : i64, scratch_operands = 0 : i64, tpu.core_type = #tpu.core_type<tc>, window_params = [{transform_indices = @transform_0, window_bounds = array<i64: 8, 256>}, {transform_indices = @transform_1, window_bounds = array<i64: 8, 1>}]} {
    %c0 = arith.constant 0 : index
    %c0_0 = arith.constant 0 : index
    %0 = vector.load %arg1[%c0, %c0_0] : memref<8x256xf32, #tpu.memory_space<vmem>>, vector<8x256xf32>
    %cst = arith.constant dense<0xFF800000> : vector<8xf32>
    %1 = vector.multi_reduction <maximumf>, %0, %cst [1] : vector<8x256xf32> to vector<8xf32>
    %2 = vector.shape_cast %1 : vector<8xf32> to vector<8x1xf32>
    %cst_1 = arith.constant 1.000000e+00 : f32
    %3 = vector.broadcast %cst_1 : f32 to vector<8x1xf32>
    %4 = arith.mulf %2, %3 : vector<8x1xf32>
    %cst_2 = arith.constant dense<0x7F800000> : vector<8xf32>
    %5 = vector.multi_reduction <minimumf>, %0, %cst_2 [1] : vector<8x256xf32> to vector<8xf32>
    %6 = vector.shape_cast %5 : vector<8xf32> to vector<8x1xf32>
    %cst_3 = arith.constant 1.000000e+00 : f32
    %7 = vector.broadcast %cst_3 : f32 to vector<8x1xf32>
    %8 = arith.mulf %6, %7 : vector<8x1xf32>
    %9 = arith.addf %4, %8 : vector<8x1xf32>
    %c0_4 = arith.constant 0 : index
    %c0_5 = arith.constant 0 : index
    %10 = vector.load %arg2[%c0_4, %c0_5] : memref<8x1xf32, #tpu.memory_space<vmem>>, vector<8x1xf32>
    tpu.vector_store %arg2[%c0_4, %c0_5], %9 {strides = array<i32>} : memref<8x1xf32, #tpu.memory_space<vmem>>, vector<8x1xf32>,
    return
  }
  func.func @transform_0(%arg0: i32) -> (i32, i32) {
    %c0_i32 = arith.constant 0 : i32
    %c0_i32_0 = arith.constant 0 : i32
    return %arg0, %c0_i32 : i32, i32
  }
  func.func @transform_1(%arg0: i32) -> (i32, i32) {
    %c0_i32 = arith.constant 0 : i32
    %c0_i32_0 = arith.constant 0 : i32
    return %arg0, %c0_i32 : i32, i32
  }
}

</mosaic_0001>

<llo_original>
// kernel: tpu_custom_call.1
$region0: #{tpu_custom_call.1}
  #allocation0 [shape = 'u32[]', space=smem, size = 0x4, offset = 0x4, fixed_abs, tag = 'smem constant byte address 0x4 - core index']
  #allocation1 [shape = 'u32[144,128]{1,0:T(1,128)}', space=vmem, size = 0x12000, scoped, tag = 'internal scratch']
  %s0 = inlined_call_operand.hbm [shape: f32[8,256], index: 0, kind: input, shape index: {}]
  %s1 = inlined_call_operand.hbm [shape: f32[8,1], index: 1, kind: output, shape index: {}]
  %s2 = sld [smem:[#allocation0]]
  $region18: #{tpu_custom_call.1} parent=0
    _
  %s4 = ssub.s32 1, %s2
  %s5 = scalar_select 0, %s4, %s2
  $region1: #{tpu_custom_call.1} parent=0
    #allocation2 [shape = 'u8[8192]{0}', space=vmem, size = 0x2000, scoped, tag = 'input window, operand 0, single buffered']
    #allocation3 [shape = 's32[1]{0}', space=sflag, size = 0x4, scoped, tag = 'scoped memory for tpu_custom_call.1']
    #allocation4 [shape = 's32[1]{0}', space=sflag, size = 0x4, scoped, tag = 'scoped memory for tpu_custom_call.1']
    #allocation5 [shape = 'u8[4096]{0}', space=vmem, size = 0x1000, scoped, tag = 'output window, operand 0, single buffered']
    %6 = vsyncpa [#allocation3], 0
    %7 = vsyncpa [#allocation4], 0
    // Predicated region
    $region2: #{tpu_custom_call.1} parent=1 // pred_check
      _
    $region3: #{tpu_custom_call.1} parent=1 // pred_check_branch
      %9 = sbr.rel (0) target = $region5
    $region4: #{tpu_custom_call.1} parent=1 // pred_region
      %s11 = ssub.s32 256, 256
      %12 = vsyncadd [#allocation3], %s11
      %s14 = sshll.u32 [#allocation2], 4
      %s15 = int_to_ptr.vmem [resolvable:$true] %s14
      %17 = dma.hbm_to_vmem [thread:$0]  %s0, 256, %s15, [#allocation3]
    $region5: #{tpu_custom_call.1} parent=1 // pred_fallthru
      _
    // Predicated region
    $region6: #{tpu_custom_call.1} parent=1 // pred_check
      _
    $region7: #{tpu_custom_call.1} parent=1 // pred_check_branch
      %19 = sbr.rel (0) target = $region9
    $region8: #{tpu_custom_call.1} parent=1 // pred_region
      %20 = dma.done [#allocation3], 256
    $region9: #{tpu_custom_call.1} parent=1 // pred_fallthru
      _
    %v21 = vld [vmem:[#allocation2] sm:$0xff]
    %v22 = vld [vmem:[#allocation2 + $0x8] sm:$0xff]
    %v23 = vmax.f32 %v21, %v22
    %24 = vmax.xlane.f32.xlu0 %v23
    %v25 = vpop.xlane.xlu0 %24
    %v26 = vmin.f32 %v21, %v22
    %27 = vmin.xlane.f32.xlu0 %v26
    %v28 = vpop.xlane.xlu0 %27
    %v29 = vadd.f32 %v25, %v28
    %vm30 = vcmask 7168
    %31 = vst.msk [vmem:[#allocation5] sm:$0xff] %vm30, %v29
    // Predicated region
    $region10: #{tpu_custom_call.1} parent=1 // pred_check
      _
    $region11: #{tpu_custom_call.1} parent=1 // pred_check_branch
      %33 = sbr.rel (0) target = $region13
    $region12: #{tpu_custom_call.1} parent=1 // pred_region
      %s35 = ssub.s32 128, 128
      %36 = vsyncadd [#allocation4], %s35
      %s38 = sshll.u32 [#allocation5], 4
      %s39 = int_to_ptr.vmem [resolvable:$true] %s38
      %41 = dma.vmem_to_hbm [thread:$0]  %s39, 128, %s1, [#allocation4]
    $region13: #{tpu_custom_call.1} parent=1 // pred_fallthru
      _
    // Predicated region
    $region14: #{tpu_custom_call.1} parent=1 // pred_check
      _
    $region15: #{tpu_custom_call.1} parent=1 // pred_check_branch
      %43 = sbr.rel (0) target = $region17
    $region16: #{tpu_custom_call.1} parent=1 // pred_region
      %44 = dma.done [#allocation4], 128
    $region17: #{tpu_custom_call.1} parent=1 // pred_fallthru
      _
    %45 = vsyncpa [#allocation3], 1
    %46 = vsyncpa [#allocation4], 1

</llo_original>
